<compile_context>
chip_gen: v5e
topology: v5e:2x2
jax: 0.10.0
libtpu: 0.0.40
codegen_flags: <defaults>
</compile_context>

<pallas_src>
import functools
import math

import jax
import jax.numpy as jnp
from jax.experimental import pallas as pl
from jax.experimental.pallas import tpu as pltpu


def _roberta_output_kernel(x_ref, w_ref, b_ref, res_ref, gamma_ref, beta_ref,
                           o_ref, *, eps):
    # x_ref:     (tm, I)  tile of dense-input rows (HBM dtype, e.g. f32)
    # w_ref:     (I, H)   full dense weight, already [in, out] (bf16)
    # b_ref:     (1, H)   dense bias (f32)
    # res_ref:   (tm, H)  residual (input_tensor) tile
    # gamma_ref: (1, H)   LayerNorm weight (f32)
    # beta_ref:  (1, H)   LayerNorm bias (f32)
    # o_ref:     (tm, H)  output tile
    x = x_ref[...].astype(w_ref.dtype)          # in-kernel cast, MXU bf16 feed
    h = jnp.dot(x, w_ref[...], preferred_element_type=jnp.float32)
    h = h + b_ref[...]                          # bias already f32
    # TODO(synk): dropout omitted (eval-mode identity); add pltpu.prng_* based
    # masking if training-mode dropout is ever required.
    h = h + res_ref[...].astype(jnp.float32)    # residual add in f32

    # One-pass row statistics: both lane reductions issued back-to-back so they
    # pipeline in the XLU slot; normalize as (h - mean) * inv_std.
    inv_n = 1.0 / h.shape[-1]
    s1 = jnp.sum(h, axis=-1, keepdims=True)
    s2 = jnp.sum(h * h, axis=-1, keepdims=True)
    mean = s1 * inv_n
    var = jnp.maximum(s2 * inv_n - mean * mean, 0.0)
    inv_std = jax.lax.rsqrt(var + eps)
    out = (h - mean) * inv_std * gamma_ref[...] + beta_ref[...]
    o_ref[...] = out.astype(o_ref.dtype)
    # TODO(synk): on compute-bound chips (v5e/v7x) the LN epilogue could be
    # chunked/overlapped with the next tile's matmul; not done here.


def _round8(n):
    return max(8, -(-n // 8) * 8)


def roberta_output(hidden_states, input_tensor, w, b, gamma, beta,
                   *, eps=1e-5, tm=512, compute_dtype=jnp.bfloat16,
                   out_dtype=None):
    """hidden_states: (B, S, I), input_tensor: (B, S, H).
    w: (I, H) = dense.weight.T (ideally already in `compute_dtype`),
    b/gamma/beta: (H,)."""
    B, S, I = hidden_states.shape
    H = input_tensor.shape[-1]
    n_rows = B * S
    out_dtype = jnp.dtype(out_dtype) if out_dtype is not None \
        else jnp.dtype(input_tensor.dtype)

    # Row tile: MXU-friendly target, clamped to the sublane-padded row count.
    tm = _round8(tm)
    tm_eff = min(tm, _round8(n_rows))
    # v7x megacore: keep the grid length >= 2 when there is enough work.
    if n_rows > 8 and pl.cdiv(n_rows, tm_eff) < 2:
        tm_eff = _round8(pl.cdiv(n_rows, 2))
    grid = (pl.cdiv(n_rows, tm_eff),)

    # No host-side cast, no host-side pad: straight reshapes only.
    x2 = hidden_states.reshape(n_rows, I)
    r2 = input_tensor.reshape(n_rows, H)

    # Weight should be stored in compute_dtype by the caller (once, at load
    # time); cast here only as a fallback.
    wc = w if w.dtype == compute_dtype else w.astype(compute_dtype)
    b2 = b.astype(jnp.float32).reshape(1, H)
    g2 = gamma.astype(jnp.float32).reshape(1, H)
    be2 = beta.astype(jnp.float32).reshape(1, H)

    kernel = functools.partial(_roberta_output_kernel, eps=eps)

    # VMEM budget from actual buffer sizes (+ headroom), clamped to a value
    # that is legal on v5e/v6e (128 MiB) and v7x (64 MiB physical).
    def nbytes(shape, dtype):
        return math.prod(shape) * jnp.dtype(dtype).itemsize
    resident = (2 * nbytes((tm_eff, I), x2.dtype)      # double-buffered x tile
                + 2 * nbytes((tm_eff, H), r2.dtype)    # double-buffered residual
                + 2 * nbytes((tm_eff, H), out_dtype)   # double-buffered output
                + 2 * nbytes((I, H), wc.dtype)         # weight (budget 2x, use 1x)
                + 2 * 3 * nbytes((1, H), jnp.float32)  # bias / gamma / beta
                + 2 * nbytes((tm_eff, max(H, 128)), jnp.float32))  # f32 h work
    vmem_limit = int(min(max(resident * 1.25 + (4 << 20), 16 << 20), 64 << 20))

    cost = pl.CostEstimate(
        flops=2 * n_rows * I * H,
        transcendentals=n_rows,  # one rsqrt per row
        bytes_accessed=(n_rows * I * jnp.dtype(x2.dtype).itemsize
                        + n_rows * H * jnp.dtype(r2.dtype).itemsize
                        + n_rows * H * out_dtype.itemsize
                        + I * H * jnp.dtype(wc.dtype).itemsize
                        + 3 * H * 4),
    )

    def run(single_buffer_params):
        def const_spec(shape):
            # Constant-index operands don't need double buffering.
            if single_buffer_params:
                return pl.BlockSpec(shape, lambda i: (0, 0),
                                    pipeline_mode=pl.Buffered(1))
            return pl.BlockSpec(shape, lambda i: (0, 0))

        return pl.pallas_call(
            kernel,
            out_shape=jax.ShapeDtypeStruct((n_rows, H), out_dtype),
            grid_spec=pl.GridSpec(
                grid=grid,
                in_specs=[
                    pl.BlockSpec((tm_eff, I), lambda i: (i, 0)),  # x tile
                    const_spec((I, H)),                           # resident W
                    const_spec((1, H)),                           # bias
                    pl.BlockSpec((tm_eff, H), lambda i: (i, 0)),  # residual
                    const_spec((1, H)),                           # gamma
                    const_spec((1, H)),                           # beta
                ],
                out_specs=pl.BlockSpec((tm_eff, H), lambda i: (i, 0)),
            ),
            compiler_params=pltpu.CompilerParams(
                dimension_semantics=("parallel",),
                vmem_limit_bytes=vmem_limit,
            ),
            cost_estimate=cost,
        )(x2, wc, b2, r2, g2, be2)

    try:
        out2 = run(single_buffer_params=True)
    except Exception:
        # JAX version without BlockSpec.pipeline_mode support: fall back to
        # default (double-buffered) specs; numerics are identical.
        out2 = run(single_buffer_params=False)

    return out2.reshape(B, S, H)


def reference(hidden_states, input_tensor, w, b, gamma, beta,
              eps=1e-5, compute_dtype=jnp.bfloat16):
    """Precision-matched reference: bf16 matmul operands, f32 accumulate/LN."""
    h = jnp.einsum("bsi,ih->bsh",
                   hidden_states.astype(compute_dtype),
                   w.astype(compute_dtype),
                   preferred_element_type=jnp.float32)
    h = h + b.astype(jnp.float32)
    h = h + input_tensor.astype(jnp.float32)
    mean = jnp.mean(h, axis=-1, keepdims=True)
    var = jnp.mean((h - mean) ** 2, axis=-1, keepdims=True)
    out = (h - mean) * jax.lax.rsqrt(var + eps) * gamma + beta
    return out.astype(input_tensor.dtype)


if __name__ == "__main__":
    eps = 1e-5  # HF RoBERTa layer_norm_eps
    key = jax.random.PRNGKey(0)
    k1, k2, k3, k4 = jax.random.split(key, 4)

    # Small RoBERTa-like config: batch=2, seq=8, hidden=128, intermediate=256.
    B, S, H, I = 2, 8, 128, 256
    hidden_states = jax.random.normal(k1, (B, S, I), dtype=jnp.float32)
    input_tensor = jax.random.normal(k2, (B, S, H), dtype=jnp.float32)
    # Parameters; weight stored as (I, H) = W^T and pre-converted to bf16 once
    # (outside the per-call path), as the MXU consumes it.
    w = (jax.random.normal(k3, (I, H), dtype=jnp.float32)
         * (1.0 / jnp.sqrt(I))).astype(jnp.bfloat16)
    b = jax.random.normal(k4, (H,), dtype=jnp.float32) * 0.02
    gamma = jnp.ones((H,), dtype=jnp.float32)
    beta = jnp.zeros((H,), dtype=jnp.float32)

    out = roberta_output(hidden_states, input_tensor, w, b, gamma, beta, eps=eps)
    out = jax.block_until_ready(out)
    ref = reference(hidden_states, input_tensor, w, b, gamma, beta, eps=eps)
    assert out.shape == (B, S, H)
    assert jnp.allclose(out, ref, atol=2e-3, rtol=2e-3)

    # Second check: row count not divisible by the tile (exercises the masked
    # partial-last-block path that replaced host-side padding).
    B2, S2 = 1, 5
    hs2 = jax.random.normal(k1, (B2, S2, I), dtype=jnp.float32)
    it2 = jax.random.normal(k2, (B2, S2, H), dtype=jnp.float32)
    out2 = roberta_output(hs2, it2, w, b, gamma, beta, eps=eps)
    out2 = jax.block_until_ready(out2)
    ref2 = reference(hs2, it2, w, b, gamma, beta, eps=eps)
    assert out2.shape == (B2, S2, H)
    assert jnp.allclose(out2, ref2, atol=2e-3, rtol=2e-3)

    print("KERNEL_OK")
</pallas_src>

<mosaic_0001>
module attributes {stable_mosaic.version = 11 : i64} {
  func.func @_roberta_output_kernel(%arg0: i32, %arg1: memref<8x256xf32, #tpu.memory_space<vmem>>, %arg2: memref<256x128xbf16, #tpu.memory_space<vmem>>, %arg3: memref<1x128xf32, #tpu.memory_space<vmem>>, %arg4: memref<8x128xf32, #tpu.memory_space<vmem>>, %arg5: memref<1x128xf32, #tpu.memory_space<vmem>>, %arg6: memref<1x128xf32, #tpu.memory_space<vmem>>, %arg7: memref<8x128xf32, #tpu.memory_space<vmem>>) attributes {dimension_semantics = [#tpu.dimension_semantics<parallel>], iteration_bounds = array<i64: 2>, scalar_prefetch = 0 : i64, scratch_operands = 0 : i64, tpu.core_type = #tpu.core_type<tc>, window_params = [{transform_indices = @transform_0, window_bounds = array<i64: 8, 256>}, {pipeline_mode = #tpu.pipeline_mode<synchronous>, transform_indices = @transform_1, window_bounds = array<i64: 256, 128>}, {pipeline_mode = #tpu.pipeline_mode<synchronous>, transform_indices = @transform_2, window_bounds = array<i64: 1, 128>}, {transform_indices = @transform_3, window_bounds = array<i64: 8, 128>}, {pipeline_mode = #tpu.pipeline_mode<synchronous>, transform_indices = @transform_4, window_bounds = array<i64: 1, 128>}, {pipeline_mode = #tpu.pipeline_mode<synchronous>, transform_indices = @transform_5, window_bounds = array<i64: 1, 128>}, {transform_indices = @transform_6, window_bounds = array<i64: 8, 128>}]} {
    %c0 = arith.constant 0 : index
    %c0_0 = arith.constant 0 : index
    %0 = vector.load %arg1[%c0, %c0_0] : memref<8x256xf32, #tpu.memory_space<vmem>>, vector<8x256xf32>
    %1 = arith.truncf %0 : vector<8x256xf32> to vector<8x256xbf16>
    %c0_1 = arith.constant 0 : index
    %c0_2 = arith.constant 0 : index
    %2 = vector.load %arg2[%c0_1, %c0_2] : memref<256x128xbf16, #tpu.memory_space<vmem>>, vector<256x128xbf16>
    %cst = arith.constant dense<0.000000e+00> : vector<8x128xf32>
    %3 = tpu.matmul %1, %2, %cst {dimension_numbers = #tpu.dot_dimension_numbers<[1], [0], [0], [1], [0, 0, 1, 1], [], []>} : vector<8x256xbf16>, vector<256x128xbf16>, vector<8x128xf32> -> vector<8x128xf32>
    %c0_3 = arith.constant 0 : index
    %c0_4 = arith.constant 0 : index
    %4 = vector.load %arg3[%c0_3, %c0_4] : memref<1x128xf32, #tpu.memory_space<vmem>>, vector<1x128xf32>
    %5 = vector.broadcast %4 : vector<1x128xf32> to vector<8x128xf32>
    %6 = arith.addf %3, %5 : vector<8x128xf32>
    %c0_5 = arith.constant 0 : index
    %c0_6 = arith.constant 0 : index
    %7 = vector.load %arg4[%c0_5, %c0_6] : memref<8x128xf32, #tpu.memory_space<vmem>>, vector<8x128xf32>
    %8 = arith.addf %6, %7 : vector<8x128xf32>
    %cst_7 = arith.constant dense<0.000000e+00> : vector<8xf32>
    %9 = vector.multi_reduction <add>, %8, %cst_7 [1] : vector<8x128xf32> to vector<8xf32>
    %10 = vector.shape_cast %9 : vector<8xf32> to vector<8x1xf32>
    %11 = arith.mulf %8, %8 : vector<8x128xf32>
    %cst_8 = arith.constant dense<0.000000e+00> : vector<8xf32>
    %12 = vector.multi_reduction <add>, %11, %cst_8 [1] : vector<8x128xf32> to vector<8xf32>
    %13 = vector.shape_cast %12 : vector<8xf32> to vector<8x1xf32>
    %cst_9 = arith.constant 7.812500e-03 : f32
    %14 = vector.broadcast %cst_9 : f32 to vector<8x1xf32>
    %15 = arith.mulf %10, %14 : vector<8x1xf32>
    %cst_10 = arith.constant 7.812500e-03 : f32
    %16 = vector.broadcast %cst_10 : f32 to vector<8x1xf32>
    %17 = arith.mulf %13, %16 : vector<8x1xf32>
    %18 = arith.mulf %15, %15 : vector<8x1xf32>
    %19 = arith.subf %17, %18 : vector<8x1xf32>
    %cst_11 = arith.constant 0.000000e+00 : f32
    %20 = vector.broadcast %cst_11 : f32 to vector<8x1xf32>
    %21 = arith.maximumf %19, %20 : vector<8x1xf32>
    %cst_12 = arith.constant 9.99999974E-6 : f32
    %22 = vector.broadcast %cst_12 : f32 to vector<8x1xf32>
    %23 = arith.addf %21, %22 : vector<8x1xf32>
    %24 = math.rsqrt %23 : vector<8x1xf32>
    %25 = vector.broadcast %15 : vector<8x1xf32> to vector<8x128xf32>
    %26 = arith.subf %8, %25 : vector<8x128xf32>
    %27 = vector.broadcast %24 : vector<8x1xf32> to vector<8x128xf32>
    %28 = arith.mulf %26, %27 : vector<8x128xf32>
    %c0_13 = arith.constant 0 : index
    %c0_14 = arith.constant 0 : index
    %29 = vector.load %arg5[%c0_13, %c0_14] : memref<1x128xf32, #tpu.memory_space<vmem>>, vector<1x128xf32>
    %30 = vector.broadcast %29 : vector<1x128xf32> to vector<8x128xf32>
    %31 = arith.mulf %28, %30 : vector<8x128xf32>
    %c0_15 = arith.constant 0 : index
    %c0_16 = arith.constant 0 : index
    %32 = vector.load %arg6[%c0_15, %c0_16] : memref<1x128xf32, #tpu.memory_space<vmem>>, vector<1x128xf32>
    %33 = vector.broadcast %32 : vector<1x128xf32> to vector<8x128xf32>
    %34 = arith.addf %31, %33 : vector<8x128xf32>
    %c0_17 = arith.constant 0 : index
    %c0_18 = arith.constant 0 : index
    %35 = vector.load %arg7[%c0_17, %c0_18] : memref<8x128xf32, #tpu.memory_space<vmem>>, vector<8x128xf32>
    tpu.vector_store %arg7[%c0_17, %c0_18], %34 {strides = array<i32>} : memref<8x128xf32, #tpu.memory_space<vmem>>, vector<8x128xf32>,
    return
  }
  func.func @transform_0(%arg0: i32) -> (i32, i32) {
    %c0_i32 = arith.constant 0 : i32
    %c0_i32_0 = arith.constant 0 : i32
    return %arg0, %c0_i32 : i32, i32
  }
  func.func @transform_1(%arg0: i32) -> (i32, i32) {
    %c0_i32 = arith.constant 0 : i32
    %c0_i32_0 = arith.constant 0 : i32
    %c0_i32_1 = arith.constant 0 : i32
    return %c0_i32, %c0_i32_0 : i32, i32
  }
  func.func @transform_2(%arg0: i32) -> (i32, i32) {
    %c0_i32 = arith.constant 0 : i32
    %c0_i32_0 = arith.constant 0 : i32
    %c0_i32_1 = arith.constant 0 : i32
    return %c0_i32, %c0_i32_0 : i32, i32
  }
  func.func @transform_3(%arg0: i32) -> (i32, i32) {
    %c0_i32 = arith.constant 0 : i32
    %c0_i32_0 = arith.constant 0 : i32
    return %arg0, %c0_i32 : i32, i32
  }
  func.func @transform_4(%arg0: i32) -> (i32, i32) {
    %c0_i32 = arith.constant 0 : i32
    %c0_i32_0 = arith.constant 0 : i32
    %c0_i32_1 = arith.constant 0 : i32
    return %c0_i32, %c0_i32_0 : i32, i32
  }
  func.func @transform_5(%arg0: i32) -> (i32, i32) {
    %c0_i32 = arith.constant 0 : i32
    %c0_i32_0 = arith.constant 0 : i32
    %c0_i32_1 = arith.constant 0 : i32
    return %c0_i32, %c0_i32_0 : i32, i32
  }
  func.func @transform_6(%arg0: i32) -> (i32, i32) {
    %c0_i32 = arith.constant 0 : i32
    %c0_i32_0 = arith.constant 0 : i32
    return %arg0, %c0_i32 : i32, i32
  }
}

module attributes {stable_mosaic.version = 11 : i64} {
  func.func @_roberta_output_kernel(%arg0: i32, %arg1: memref<8x256xf32, #tpu.memory_space<vmem>>, %arg2: memref<256x128xbf16, #tpu.memory_space<vmem>>, %arg3: memref<1x128xf32, #tpu.memory_space<vmem>>, %arg4: memref<8x128xf32, #tpu.memory_space<vmem>>, %arg5: memref<1x128xf32, #tpu.memory_space<vmem>>, %arg6: memref<1x128xf32, #tpu.memory_space<vmem>>, %arg7: memref<8x128xf32, #tpu.memory_space<vmem>>) attributes {dimension_semantics = [#tpu.dimension_semantics<parallel>], iteration_bounds = array<i64: 2>, scalar_prefetch = 0 : i64, scratch_operands = 0 : i64, tpu.core_type = #tpu.core_type<tc>, window_params = [{transform_indices = @transform_0, window_bounds = array<i64: 8, 256>}, {pipeline_mode = #tpu.pipeline_mode<synchronous>, transform_indices = @transform_1, window_bounds = array<i64: 256, 128>}, {pipeline_mode = #tpu.pipeline_mode<synchronous>, transform_indices = @transform_2, window_bounds = array<i64: 1, 128>}, {transform_indices = @transform_3, window_bounds = array<i64: 8, 128>}, {pipeline_mode = #tpu.pipeline_mode<synchronous>, transform_indices = @transform_4, window_bounds = array<i64: 1, 128>}, {pipeline_mode = #tpu.pipeline_mode<synchronous>, transform_indices = @transform_5, window_bounds = array<i64: 1, 128>}, {transform_indices = @transform_6, window_bounds = array<i64: 8, 128>}]} {
    %c0 = arith.constant 0 : index
    %c0_0 = arith.constant 0 : index
    %0 = vector.load %arg1[%c0, %c0_0] : memref<8x256xf32, #tpu.memory_space<vmem>>, vector<8x256xf32>
    %1 = arith.truncf %0 : vector<8x256xf32> to vector<8x256xbf16>
    %c0_1 = arith.constant 0 : index
    %c0_2 = arith.constant 0 : index
    %2 = vector.load %arg2[%c0_1, %c0_2] : memref<256x128xbf16, #tpu.memory_space<vmem>>, vector<256x128xbf16>
    %cst = arith.constant dense<0.000000e+00> : vector<8x128xf32>
    %3 = tpu.matmul %1, %2, %cst {dimension_numbers = #tpu.dot_dimension_numbers<[1], [0], [0], [1], [0, 0, 1, 1], [], []>} : vector<8x256xbf16>, vector<256x128xbf16>, vector<8x128xf32> -> vector<8x128xf32>
    %c0_3 = arith.constant 0 : index
    %c0_4 = arith.constant 0 : index
    %4 = vector.load %arg3[%c0_3, %c0_4] : memref<1x128xf32, #tpu.memory_space<vmem>>, vector<1x128xf32>
    %5 = vector.broadcast %4 : vector<1x128xf32> to vector<8x128xf32>
    %6 = arith.addf %3, %5 : vector<8x128xf32>
    %c0_5 = arith.constant 0 : index
    %c0_6 = arith.constant 0 : index
    %7 = vector.load %arg4[%c0_5, %c0_6] : memref<8x128xf32, #tpu.memory_space<vmem>>, vector<8x128xf32>
    %8 = arith.addf %6, %7 : vector<8x128xf32>
    %cst_7 = arith.constant dense<0.000000e+00> : vector<8xf32>
    %9 = vector.multi_reduction <add>, %8, %cst_7 [1] : vector<8x128xf32> to vector<8xf32>
    %10 = vector.shape_cast %9 : vector<8xf32> to vector<8x1xf32>
    %11 = arith.mulf %8, %8 : vector<8x128xf32>
    %cst_8 = arith.constant dense<0.000000e+00> : vector<8xf32>
    %12 = vector.multi_reduction <add>, %11, %cst_8 [1] : vector<8x128xf32> to vector<8xf32>
    %13 = vector.shape_cast %12 : vector<8xf32> to vector<8x1xf32>
    %cst_9 = arith.constant 7.812500e-03 : f32
    %14 = vector.broadcast %cst_9 : f32 to vector<8x1xf32>
    %15 = arith.mulf %10, %14 : vector<8x1xf32>
    %cst_10 = arith.constant 7.812500e-03 : f32
    %16 = vector.broadcast %cst_10 : f32 to vector<8x1xf32>
    %17 = arith.mulf %13, %16 : vector<8x1xf32>
    %18 = arith.mulf %15, %15 : vector<8x1xf32>
    %19 = arith.subf %17, %18 : vector<8x1xf32>
    %cst_11 = arith.constant 0.000000e+00 : f32
    %20 = vector.broadcast %cst_11 : f32 to vector<8x1xf32>
    %21 = arith.maximumf %19, %20 : vector<8x1xf32>
    %cst_12 = arith.constant 9.99999974E-6 : f32
    %22 = vector.broadcast %cst_12 : f32 to vector<8x1xf32>
    %23 = arith.addf %21, %22 : vector<8x1xf32>
    %24 = math.rsqrt %23 : vector<8x1xf32>
    %25 = vector.broadcast %15 : vector<8x1xf32> to vector<8x128xf32>
    %26 = arith.subf %8, %25 : vector<8x128xf32>
    %27 = vector.broadcast %24 : vector<8x1xf32> to vector<8x128xf32>
    %28 = arith.mulf %26, %27 : vector<8x128xf32>
    %c0_13 = arith.constant 0 : index
    %c0_14 = arith.constant 0 : index
    %29 = vector.load %arg5[%c0_13, %c0_14] : memref<1x128xf32, #tpu.memory_space<vmem>>, vector<1x128xf32>
    %30 = vector.broadcast %29 : vector<1x128xf32> to vector<8x128xf32>
    %31 = arith.mulf %28, %30 : vector<8x128xf32>
    %c0_15 = arith.constant 0 : index
    %c0_16 = arith.constant 0 : index
    %32 = vector.load %arg6[%c0_15, %c0_16] : memref<1x128xf32, #tpu.memory_space<vmem>>, vector<1x128xf32>
    %33 = vector.broadcast %32 : vector<1x128xf32> to vector<8x128xf32>
    %34 = arith.addf %31, %33 : vector<8x128xf32>
    %c0_17 = arith.constant 0 : index
    %c0_18 = arith.constant 0 : index
    %35 = vector.load %arg7[%c0_17, %c0_18] : memref<8x128xf32, #tpu.memory_space<vmem>>, vector<8x128xf32>
    tpu.vector_store %arg7[%c0_17, %c0_18], %34 {strides = array<i32>} : memref<8x128xf32, #tpu.memory_space<vmem>>, vector<8x128xf32>,
    return
  }
  func.func @transform_0(%arg0: i32) -> (i32, i32) {
    %c0_i32 = arith.constant 0 : i32
    %c0_i32_0 = arith.constant 0 : i32
    return %arg0, %c0_i32 : i32, i32
  }
  func.func @transform_1(%arg0: i32) -> (i32, i32) {
    %c0_i32 = arith.constant 0 : i32
    %c0_i32_0 = arith.constant 0 : i32
    %c0_i32_1 = arith.constant 0 : i32
    return %c0_i32, %c0_i32_0 : i32, i32
  }
  func.func @transform_2(%arg0: i32) -> (i32, i32) {
    %c0_i32 = arith.constant 0 : i32
    %c0_i32_0 = arith.constant 0 : i32
    %c0_i32_1 = arith.constant 0 : i32
    return %c0_i32, %c0_i32_0 : i32, i32
  }
  func.func @transform_3(%arg0: i32) -> (i32, i32) {
    %c0_i32 = arith.constant 0 : i32
    %c0_i32_0 = arith.constant 0 : i32
    return %arg0, %c0_i32 : i32, i32
  }
  func.func @transform_4(%arg0: i32) -> (i32, i32) {
    %c0_i32 = arith.constant 0 : i32
    %c0_i32_0 = arith.constant 0 : i32
    %c0_i32_1 = arith.constant 0 : i32
    return %c0_i32, %c0_i32_0 : i32, i32
  }
  func.func @transform_5(%arg0: i32) -> (i32, i32) {
    %c0_i32 = arith.constant 0 : i32
    %c0_i32_0 = arith.constant 0 : i32
    %c0_i32_1 = arith.constant 0 : i32
    return %c0_i32, %c0_i32_0 : i32, i32
  }
  func.func @transform_6(%arg0: i32) -> (i32, i32) {
    %c0_i32 = arith.constant 0 : i32
    %c0_i32_0 = arith.constant 0 : i32
    return %arg0, %c0_i32 : i32, i32
  }
}

</mosaic_0001>

<llo_original>
// kernel: tpu_custom_call.1
$region0: #{tpu_custom_call.1}
  #allocation0 [shape = 'u32[]', space=smem, size = 0x4, offset = 0x4, fixed_abs, tag = 'smem constant byte address 0x4 - core index']
  #allocation1 [shape = 'u32[72,128]{1,0:T(1,128)}', space=vmem, size = 0x9000, scoped, tag = 'internal scratch']
  %s0 = inlined_call_operand.hbm [shape: f32[16,256], index: 0, kind: input, shape index: {}]
  %s1 = inlined_call_operand.hbm [shape: bf16[256,128], index: 1, kind: input, shape index: {}]
  %s2 = inlined_call_operand.vmem [shape: f32[1,128], index: 2, kind: input, shape index: {}]
  %s3 = inlined_call_operand.hbm [shape: f32[16,128], index: 3, kind: input, shape index: {}]
  %s4 = inlined_call_operand.vmem [shape: f32[1,128], index: 4, kind: input, shape index: {}]
  %s5 = inlined_call_operand.vmem [shape: f32[1,128], index: 5, kind: input, shape index: {}]
  %s6 = inlined_call_operand.hbm [shape: f32[16,128], index: 6, kind: output, shape index: {}]
  %s7 = sld [smem:[#allocation0]]
  $region69: #{tpu_custom_call.1} parent=0
    _
  %s9 = ssub.s32 1, %s7
  %s10 = scalar_select 0, %s9, %s7
  $region1: #{tpu_custom_call.1} parent=0
    #allocation2 [shape = 'u8[16384]{0}', space=vmem, size = 0x4000, scoped, tag = 'input window, operand 0']
    #allocation3 [shape = 's32[2]{0}', space=sflag, size = 0x8, scoped, tag = 'scoped memory for tpu_custom_call.1']
    #allocation4 [shape = 's32[2]{0}', space=sflag, size = 0x8, scoped, tag = 'scoped memory for tpu_custom_call.1']
    #allocation5 [shape = 'u8[65536]{0}', space=vmem, size = 0x10000, scoped, tag = 'input window, operand 1, single buffered']
    #allocation6 [shape = 's32[1]{0}', space=sflag, size = 0x4, scoped, tag = 'scoped memory for tpu_custom_call.1']
    #allocation7 [shape = 'u8[8192]{0}', space=vmem, size = 0x2000, scoped, tag = 'input window, operand 3']
    #allocation8 [shape = 'u8[8192]{0}', space=vmem, size = 0x2000, scoped, tag = 'output window, operand 0']
    %11 = vsyncpa [#allocation3], 0
    %s12 = scalar_lea.sflag [#allocation3], 1
    %13 = vsyncpa %s12, 0
    %14 = vsyncpa [#allocation6], 0
    %15 = vsyncpa [#allocation4], 0
    %s16 = scalar_lea.sflag [#allocation4], 1
    %17 = vsyncpa %s16, 0
    loop: start=0, step=1, limit=4
    $region2: #{tpu_custom_call.1} parent=1 // loop_pre_header
      _
    $region3: #{tpu_custom_call.1} parent=1 // loop_header
      %s19 = sphi 0, %s23
      %p20 = scmp.ge.s32.totalorder %s19, 4
      %s29 = sphi 0, %s31
      %s32 = sphi 0, %s29
      %s33 = sphi 0, %s32
      %s49 = sphi 0, %s33
      %s53 = sphi 0, %s53
      %s55 = sphi 0, %s53
      %s56 = sphi 0, %s55
      %s70 = sphi 0, %s56
      %s74 = sphi 0, %s74
      %s76 = sphi 0, %s74
      %s77 = sphi 0, %s76
      %s91 = sphi 0, %s77
      %s97 = sphi 0, %s99
      %s100 = sphi 0, %s97
      %s101 = sphi 0, %s100
      %s117 = sphi 0, %s101
      %s121 = sphi 0, %s121
      %s123 = sphi 0, %s121
      %s124 = sphi 0, %s123
      %s138 = sphi 0, %s124
      %s142 = sphi 0, %s142
      %s144 = sphi 0, %s142
      %s145 = sphi 0, %s144
      %s159 = sphi 0, %s145
      %s165 = sphi 0, %s167
      %s168 = sphi 0, %s165
      %s169 = sphi 0, %s168
      %s185 = sphi 0, %s169
    $region4: #{tpu_custom_call.1} parent=1 // loop_header_branch
      %22 = sbr.rel (%p20) target = $region8
    $region5: #{tpu_custom_call.1} parent=1 // loop_body
      %s24 = ssub.s32 %s19, 1
      %s25 = ssub.s32 %s19, 2
      %s26 = sadd.s32 %s19, 1
      %s27 = ssub.s32 %s19, %s26
      %p28 = scmp.eq.s32.totalorder %s27, 0
      %s30 = sadd.s32 %s29, 1
      %s31 = scalar_select %p28, %s29, %s30
      %p34 = pneg %p28
      %p35 = scmp.eq.s32.totalorder %s19, 1
      %p36 = por %p34, %p35
      %p37 = scmp.ne.s32.totalorder %s29, %s32
      %p38 = scmp.eq.s32.totalorder %s19, 0
      %p39 = por %p37, %p38
      %p40 = scmp.ne.s32.totalorder %s29, %s32
      %p41 = scmp.eq.s32.totalorder %s24, 1
      %p42 = por %p40, %p41
      %p43 = scmp.ne.s32.totalorder %s32, %s33
      %p44 = scmp.eq.s32.totalorder %s24, 0
      %p45 = por %p43, %p44
      %p46 = scmp.ne.s32.totalorder %s32, %s33
      %p47 = scmp.eq.s32.totalorder %s25, 1
      %p48 = por %p46, %p47
      %p50 = scmp.ne.s32.totalorder %s33, %s49
      %p51 = scmp.eq.s32.totalorder %s25, 0
      %p52 = por %p50, %p51
      %s54 = sadd.s32 %s53, 1
      %p57 = scmp.eq.s32.totalorder %s19, 1
      %p58 = scmp.ne.s32.totalorder %s53, %s55
      %p59 = scmp.eq.s32.totalorder %s19, 0
      %p60 = por %p58, %p59
      %p61 = scmp.ne.s32.totalorder %s53, %s55
      %p62 = scmp.eq.s32.totalorder %s24, 1
      %p63 = por %p61, %p62
      %p64 = scmp.ne.s32.totalorder %s55, %s56
      %p65 = scmp.eq.s32.totalorder %s24, 0
      %p66 = por %p64, %p65
      %p67 = scmp.ne.s32.totalorder %s55, %s56
      %p68 = scmp.eq.s32.totalorder %s25, 1
      %p69 = por %p67, %p68
      %p71 = scmp.ne.s32.totalorder %s56, %s70
      %p72 = scmp.eq.s32.totalorder %s25, 0
      %p73 = por %p71, %p72
      %s75 = sadd.s32 %s74, 1
      %p78 = scmp.eq.s32.totalorder %s19, 1
      %p79 = scmp.ne.s32.totalorder %s74, %s76
      %p80 = scmp.eq.s32.totalorder %s19, 0
      %p81 = por %p79, %p80
      %p82 = scmp.ne.s32.totalorder %s74, %s76
      %p83 = scmp.eq.s32.totalorder %s24, 1
      %p84 = por %p82, %p83
      %p85 = scmp.ne.s32.totalorder %s76, %s77
      %p86 = scmp.eq.s32.totalorder %s24, 0
      %p87 = por %p85, %p86
      %p88 = scmp.ne.s32.totalorder %s76, %s77
      %p89 = scmp.eq.s32.totalorder %s25, 1
      %p90 = por %p88, %p89
      %p92 = scmp.ne.s32.totalorder %s77, %s91
      %p93 = scmp.eq.s32.totalorder %s25, 0
      %p94 = por %p92, %p93
      %s95 = ssub.s32 %s19, %s26
      %p96 = scmp.eq.s32.totalorder %s95, 0
      %s98 = sadd.s32 %s97, 1
      %s99 = scalar_select %p96, %s97, %s98
      %p102 = pneg %p96
      %p103 = scmp.eq.s32.totalorder %s19, 1
      %p104 = por %p102, %p103
      %p105 = scmp.ne.s32.totalorder %s97, %s100
      %p106 = scmp.eq.s32.totalorder %s19, 0
      %p107 = por %p105, %p106
      %p108 = scmp.ne.s32.totalorder %s97, %s100
      %p109 = scmp.eq.s32.totalorder %s24, 1
      %p110 = por %p108, %p109
      %p111 = scmp.ne.s32.totalorder %s100, %s101
      %p112 = scmp.eq.s32.totalorder %s24, 0
      %p113 = por %p111, %p112
      %p114 = scmp.ne.s32.totalorder %s100, %s101
      %p115 = scmp.eq.s32.totalorder %s25, 1
      %p116 = por %p114, %p115
      %p118 = scmp.ne.s32.totalorder %s101, %s117
      %p119 = scmp.eq.s32.totalorder %s25, 0
      %p120 = por %p118, %p119
      %s122 = sadd.s32 %s121, 1
      %p125 = scmp.eq.s32.totalorder %s19, 1
      %p126 = scmp.ne.s32.totalorder %s121, %s123
      %p127 = scmp.eq.s32.totalorder %s19, 0
      %p128 = por %p126, %p127
      %p129 = scmp.ne.s32.totalorder %s121, %s123
      %p130 = scmp.eq.s32.totalorder %s24, 1
      %p131 = por %p129, %p130
      %p132 = scmp.ne.s32.totalorder %s123, %s124
      %p133 = scmp.eq.s32.totalorder %s24, 0
      %p134 = por %p132, %p133
      %p135 = scmp.ne.s32.totalorder %s123, %s124
      %p136 = scmp.eq.s32.totalorder %s25, 1
      %p137 = por %p135, %p136
      %p139 = scmp.ne.s32.totalorder %s124, %s138
      %p140 = scmp.eq.s32.totalorder %s25, 0
      %p141 = por %p139, %p140
      %s143 = sadd.s32 %s142, 1
      %p146 = scmp.eq.s32.totalorder %s19, 1
      %p147 = scmp.ne.s32.totalorder %s142, %s144
      %p148 = scmp.eq.s32.totalorder %s19, 0
      %p149 = por %p147, %p148
      %p150 = scmp.ne.s32.totalorder %s142, %s144
      %p151 = scmp.eq.s32.totalorder %s24, 1
      %p152 = por %p150, %p151
      %p153 = scmp.ne.s32.totalorder %s144, %s145
      %p154 = scmp.eq.s32.totalorder %s24, 0
      %p155 = por %p153, %p154
      %p156 = scmp.ne.s32.totalorder %s144, %s145
      %p157 = scmp.eq.s32.totalorder %s25, 1
      %p158 = por %p156, %p157
      %p160 = scmp.ne.s32.totalorder %s145, %s159
      %p161 = scmp.eq.s32.totalorder %s25, 0
      %p162 = por %p160, %p161
      %s163 = ssub.s32 %s19, %s26
      %p164 = scmp.eq.s32.totalorder %s163, 0
      %s166 = sadd.s32 %s165, 1
      %s167 = scalar_select %p164, %s165, %s166
      %p170 = pneg %p164
      %p171 = scmp.eq.s32.totalorder %s19, 1
      %p172 = por %p170, %p171
      %p173 = scmp.ne.s32.totalorder %s165, %s168
      %p174 = scmp.eq.s32.totalorder %s19, 0
      %p175 = por %p173, %p174
      %p176 = scmp.ne.s32.totalorder %s165, %s168
      %p177 = scmp.eq.s32.totalorder %s24, 1
      %p178 = por %p176, %p177
      %p179 = scmp.ne.s32.totalorder %s168, %s169
      %p180 = scmp.eq.s32.totalorder %s24, 0
      %p181 = por %p179, %p180
      %p182 = scmp.ne.s32.totalorder %s168, %s169
      %p183 = scmp.eq.s32.totalorder %s25, 1
      %p184 = por %p182, %p183
      %p186 = scmp.ne.s32.totalorder %s169, %s185
      %p187 = scmp.eq.s32.totalorder %s25, 0
      %p188 = por %p186, %p187
      %p189 = scmp.le.s32.totalorder 1, %s19
      %p190 = scmp.lt.s32.totalorder %s19, 3
      %p191 = pnand %p189, %p190
      %p192 = pneg %p191
      // Predicated region
      $region9: #{tpu_custom_call.1} parent=5 // pred_check
        _
      $region10: #{tpu_custom_call.1} parent=5 // pred_check_branch
        %194 = sbr.rel (%p191) target = $region12
      $region11: #{tpu_custom_call.1} parent=5 // pred_region
        %s195 = ssub.s32 %s19, 1
        // Predicated region
        $region13: #{tpu_custom_call.1} parent=11 // pred_check
          %p196 = pneg %p66
        $region14: #{tpu_custom_call.1} parent=11 // pred_check_branch
          %198 = sbr.rel (%p196) target = $region16
        $region15: #{tpu_custom_call.1} parent=11 // pred_region
          %200 = vsyncadd [#allocation6], 0
          %s201 = sshll.u32 %s1, 4
          %s202 = int_to_ptr.hbm [resolvable:$true] %s201
          %s203 = sshll.u32 [#allocation5], 4
          %s204 = int_to_ptr.vmem [resolvable:$true] %s203
          %209 = dma.hbm_to_vmem [thread:$0]  %s202, 2048, %s204, [#allocation6], 64, 64, 4
        $region16: #{tpu_custom_call.1} parent=11 // pred_fallthru
          _
        // Predicated region
        $region17: #{tpu_custom_call.1} parent=11 // pred_check
          %p210 = pneg %p87
        $region18: #{tpu_custom_call.1} parent=11 // pred_check_branch
          %212 = sbr.rel (%p210) target = $region20
        $region19: #{tpu_custom_call.1} parent=11 // pred_region
          _
        $region20: #{tpu_custom_call.1} parent=11 // pred_fallthru
          _
        // Predicated region
        $region21: #{tpu_custom_call.1} parent=11 // pred_check
          %p213 = pneg %p134
        $region22: #{tpu_custom_call.1} parent=11 // pred_check_branch
          %215 = sbr.rel (%p213) target = $region24
        $region23: #{tpu_custom_call.1} parent=11 // pred_region
          _
        $region24: #{tpu_custom_call.1} parent=11 // pred_fallthru
          _
        // Predicated region
        $region25: #{tpu_custom_call.1} parent=11 // pred_check
          %p216 = pneg %p155
        $region26: #{tpu_custom_call.1} parent=11 // pred_check_branch
          %218 = sbr.rel (%p216) target = $region28
        $region27: #{tpu_custom_call.1} parent=11 // pred_region
          _
        $region28: #{tpu_custom_call.1} parent=11 // pred_fallthru
          _
      $region12: #{tpu_custom_call.1} parent=5 // pred_fallthru
        _
      %p219 = scmp.lt.s32.totalorder %s19, 2
      // Predicated region
      $region29: #{tpu_custom_call.1} parent=5 // pred_check
        %p220 = pneg %p219
      $region30: #{tpu_custom_call.1} parent=5 // pred_check_branch
        %222 = sbr.rel (%p220) target = $region32
      $region31: #{tpu_custom_call.1} parent=5 // pred_region
        // Predicated region
        $region33: #{tpu_custom_call.1} parent=31 // pred_check
          %p223 = pneg %p39
        $region34: #{tpu_custom_call.1} parent=31 // pred_check_branch
          %225 = sbr.rel (%p223) target = $region36
        $region35: #{tpu_custom_call.1} parent=31 // pred_region
          %s226 = sand.u32 %s19, 1
          %s227 = scalar_lea.sflag [#allocation3], %s226
          %s228 = sand.u32 %s29, 1
          %s229 = smul.addr %s228, 16
          %s230 = scalar_lea.vmem [#allocation2], %s229
          %232 = vsyncadd %s227, 0
          %s233 = smul.addr %s19, 2
          %s234 = smul.addr %s233, 8
          %s235 = scalar_lea.hbm %s0, %s234
          %s237 = sshll.u32 %s235, 4
          %s238 = int_to_ptr.hbm [resolvable:$true] %s237
          %s239 = sshll.u32 %s230, 4
          %s240 = int_to_ptr.vmem [resolvable:$true] %s239
          %242 = dma.hbm_to_vmem [thread:$0]  %s238, 256, %s240, %s227
        $region36: #{tpu_custom_call.1} parent=31 // pred_fallthru
          _
        // Predicated region
        $region37: #{tpu_custom_call.1} parent=31 // pred_check
          %p243 = pneg %p107
        $region38: #{tpu_custom_call.1} parent=31 // pred_check_branch
          %245 = sbr.rel (%p243) target = $region40
        $region39: #{tpu_custom_call.1} parent=31 // pred_region
          %s246 = sand.u32 %s19, 1
          %s247 = scalar_lea.sflag [#allocation3], %s246
          %s248 = sand.u32 %s97, 1
          %s249 = smul.addr %s248, 8
          %s250 = scalar_lea.vmem [#allocation7], %s249
          %252 = vsyncadd %s247, 0
          %s253 = smul.addr %s19, 8
          %s254 = scalar_lea.hbm %s3, %s253
          %s256 = sshll.u32 %s254, 4
          %s257 = int_to_ptr.hbm [resolvable:$true] %s256
          %s258 = sshll.u32 %s250, 4
          %s259 = int_to_ptr.vmem [resolvable:$true] %s258
          %261 = dma.hbm_to_vmem [thread:$0]  %s257, 128, %s259, %s247
        $region40: #{tpu_custom_call.1} parent=31 // pred_fallthru
          _
      $region32: #{tpu_custom_call.1} parent=5 // pred_fallthru
        _
      %p262 = scmp.le.s32.totalorder 1, %s19
      %p263 = scmp.lt.s32.totalorder %s19, 3
      %p264 = pnand %p262, %p263
      %p265 = pneg %p264
      // Predicated region
      $region41: #{tpu_custom_call.1} parent=5 // pred_check
        _
      $region42: #{tpu_custom_call.1} parent=5 // pred_check_branch
        %267 = sbr.rel (%p264) target = $region44
      $region43: #{tpu_custom_call.1} parent=5 // pred_region
        %s268 = ssub.s32 %s19, 1
        %s269 = sand.u32 %s24, 1
        %s270 = scalar_lea.sflag [#allocation3], %s269
        %s271 = sand.u32 %s32, 1
        %s272 = smul.addr %s271, 16
        %s273 = scalar_lea.vmem [#allocation2], %s272
        // Predicated region
        $region45: #{tpu_custom_call.1} parent=43 // pred_check
          %p274 = pneg %p45
        $region46: #{tpu_custom_call.1} parent=43 // pred_check_branch
          %276 = sbr.rel (%p274) target = $region48
        $region47: #{tpu_custom_call.1} parent=43 // pred_region
          %278 = dma.done %s270, 256
        $region48: #{tpu_custom_call.1} parent=43 // pred_fallthru
          _
        // Predicated region
        $region49: #{tpu_custom_call.1} parent=43 // pred_check
          %p279 = pneg %p66
        $region50: #{tpu_custom_call.1} parent=43 // pred_check_branch
          %281 = sbr.rel (%p279) target = $region52
        $region51: #{tpu_custom_call.1} parent=43 // pred_region
          %283 = dma.done [#allocation6], 2048
        $region52: #{tpu_custom_call.1} parent=43 // pred_fallthru
          _
        %s284 = sand.u32 %s24, 1
        %s285 = scalar_lea.sflag [#allocation3], %s284
        %s286 = sand.u32 %s100, 1
        %s287 = smul.addr %s286, 8
        %s288 = scalar_lea.vmem [#allocation7], %s287
        // Predicated region
        $region53: #{tpu_custom_call.1} parent=43 // pred_check
          %p289 = pneg %p113
        $region54: #{tpu_custom_call.1} parent=43 // pred_check_branch
          %291 = sbr.rel (%p289) target = $region56
        $region55: #{tpu_custom_call.1} parent=43 // pred_region
          %293 = dma.done %s285, 128
        $region56: #{tpu_custom_call.1} parent=43 // pred_fallthru
          _
        %s294 = sand.u32 %s24, 1
        %s295 = scalar_lea.sflag [#allocation3], %s294
        %s296 = sand.u32 %s32, 1
        %s297 = smul.addr %s296, 16
        %s298 = scalar_lea.vmem [#allocation2], %s297
        %p299 = pneg %p45
        %p300 = pneg %p42
        %p301 = pneg %p66
        %p302 = pneg %p63
        %p303 = pneg %p87
        %p304 = pneg %p84
        %s305 = sand.u32 %s24, 1
        %s306 = scalar_lea.sflag [#allocation3], %s305
        %s307 = sand.u32 %s100, 1
        %s308 = smul.addr %s307, 8
        %s309 = scalar_lea.vmem [#allocation7], %s308
        %p310 = pneg %p113
        %p311 = pneg %p110
        %p312 = pneg %p134
        %p313 = pneg %p131
        %p314 = pneg %p155
        %p315 = pneg %p152
        %p316 = pneg %p181
        %p317 = pneg %p178
        %s318 = sand.u32 %s168, 1
        %s319 = scalar_lea.sflag [#allocation4], %s318
        %s320 = sand.u32 %s168, 1
        %s321 = smul.addr %s320, 8
        %s322 = scalar_lea.vmem [#allocation8], %s321
        %v323 = vld [vmem:[%s273] sm:$0xff]
        %v324 = vld [vmem:[%s273 + $0x8] sm:$0xff]
        %v325 = vpack.c.bf16 %v323, %v323
        %v326 = vpack.c.bf16 %v324, %v324
        %v327 = vld [vmem:[#allocation5] sm:$0xf]
        %v328 = vld [vmem:[#allocation5 + $0x4] sm:$0xf]
        %v329 = vld [vmem:[#allocation5 + $0x8] sm:$0xf]
        %v330 = vld [vmem:[#allocation5 + $0xc] sm:$0xf]
        %v331 = vld [vmem:[#allocation5 + $0x10] sm:$0xf]
        %v332 = vld [vmem:[#allocation5 + $0x14] sm:$0xf]
        %v333 = vld [vmem:[#allocation5 + $0x18] sm:$0xf]
        %v334 = vld [vmem:[#allocation5 + $0x1c] sm:$0xf]
        %v335 = vld [vmem:[#allocation5 + $0x20] sm:$0xf]
        %v336 = vld [vmem:[#allocation5 + $0x24] sm:$0xf]
        %v337 = vld [vmem:[#allocation5 + $0x28] sm:$0xf]
        %v338 = vld [vmem:[#allocation5 + $0x2c] sm:$0xf]
        %v339 = vld [vmem:[#allocation5 + $0x30] sm:$0xf]
        %v340 = vld [vmem:[#allocation5 + $0x34] sm:$0xf]
        %v341 = vld [vmem:[#allocation5 + $0x38] sm:$0xf]
        %v342 = vld [vmem:[#allocation5 + $0x3c] sm:$0xf]
        %v343 = vld [vmem:[#allocation5 + $0x40] sm:$0xf]
        %v344 = vld [vmem:[#allocation5 + $0x44] sm:$0xf]
        %v345 = vld [vmem:[#allocation5 + $0x48] sm:$0xf]
        %v346 = vld [vmem:[#allocation5 + $0x4c] sm:$0xf]
        %v347 = vld [vmem:[#allocation5 + $0x50] sm:$0xf]
        %v348 = vld [vmem:[#allocation5 + $0x54] sm:$0xf]
        %v349 = vld [vmem:[#allocation5 + $0x58] sm:$0xf]
        %v350 = vld [vmem:[#allocation5 + $0x5c] sm:$0xf]
        %v351 = vld [vmem:[#allocation5 + $0x60] sm:$0xf]
        %v352 = vld [vmem:[#allocation5 + $0x64] sm:$0xf]
        %v353 = vld [vmem:[#allocation5 + $0x68] sm:$0xf]
        %v354 = vld [vmem:[#allocation5 + $0x6c] sm:$0xf]
        %v355 = vld [vmem:[#allocation5 + $0x70] sm:$0xf]
        %v356 = vld [vmem:[#allocation5 + $0x74] sm:$0xf]
        %v357 = vld [vmem:[#allocation5 + $0x78] sm:$0xf]
        %v358 = vld [vmem:[#allocation5 + $0x7c] sm:$0xf]
        %v359 = vld [vmem:[%s2] sm:$0x1]
        %v361 = vperm.slane %v359, 0
        %v395 = vunpack.c.l.b16 %v327
        %v396 = vunpack.c.l.b16 %v328
        %v397 = vunpack.c.l.b16 %v329
        %v398 = vunpack.c.l.b16 %v330
        %v399 = vunpack.c.l.b16 %v331
        %v400 = vunpack.c.l.b16 %v332
        %v401 = vunpack.c.l.b16 %v333
        %v402 = vunpack.c.l.b16 %v334
        %v403 = vunpack.c.l.b16 %v335
        %v404 = vunpack.c.l.b16 %v336
        %v405 = vunpack.c.l.b16 %v337
        %v406 = vunpack.c.l.b16 %v338
        %v407 = vunpack.c.l.b16 %v339
        %v408 = vunpack.c.l.b16 %v340
        %v409 = vunpack.c.l.b16 %v341
        %v410 = vunpack.c.l.b16 %v342
        %v411 = vunpack.c.l.b16 %v343
        %v412 = vunpack.c.l.b16 %v344
        %v413 = vunpack.c.l.b16 %v345
        %v414 = vunpack.c.l.b16 %v346
        %v415 = vunpack.c.l.b16 %v347
        %v416 = vunpack.c.l.b16 %v348
        %v417 = vunpack.c.l.b16 %v349
        %v418 = vunpack.c.l.b16 %v350
        %v419 = vunpack.c.l.b16 %v351
        %v420 = vunpack.c.l.b16 %v352
        %v421 = vunpack.c.l.b16 %v353
        %v422 = vunpack.c.l.b16 %v354
        %v423 = vunpack.c.l.b16 %v355
        %v424 = vunpack.c.l.b16 %v356
        %v425 = vunpack.c.l.b16 %v357
        %v426 = vunpack.c.l.b16 %v358
        %v427 = vpack.c.b16 %v396, %v395
        %v428 = vpack.c.b16 %v398, %v397
        %v429 = vpack.c.b16 %v400, %v399
        %v430 = vpack.c.b16 %v402, %v401
        %v431 = vpack.c.b16 %v404, %v403
        %v432 = vpack.c.b16 %v406, %v405
        %v433 = vpack.c.b16 %v408, %v407
        %v434 = vpack.c.b16 %v410, %v409
        %v435 = vpack.c.b16 %v412, %v411
        %v436 = vpack.c.b16 %v414, %v413
        %v437 = vpack.c.b16 %v416, %v415
        %v438 = vpack.c.b16 %v418, %v417
        %v439 = vpack.c.b16 %v420, %v419
        %v440 = vpack.c.b16 %v422, %v421
        %v441 = vpack.c.b16 %v424, %v423
        %v442 = vpack.c.b16 %v426, %v425
        %459 = vmatpush.bf16.msra.mxu0 %v434
        %460 = vmatpush.bf16.msra.mxu0 %v433
        %461 = vmatpush.bf16.msra.mxu0 %v432
        %462 = vmatpush.bf16.msra.mxu0 %v431
        %463 = vmatpush.bf16.msra.mxu0 %v430
        %464 = vmatpush.bf16.msra.mxu0 %v429
        %465 = vmatpush.bf16.msra.mxu0 %v428
        %466 = vmatpush.bf16.msra.mxu0 %v427
        %467 = vmatmul.bf16.gmra.mxu0 %v325
        %v468 = vpop.f32.mrf.mxu0
        %v469 = vadd.f32 %v361, %v468
        %v470 = vpop.f32.mrf.mxu0
        %471 = vdwg.mxu0
        %472 = vmatpush.bf16.msra.mxu0 %v442
        %473 = vmatpush.bf16.msra.mxu0 %v441
        %474 = vmatpush.bf16.msra.mxu0 %v440
        %475 = vmatpush.bf16.msra.mxu0 %v439
        %476 = vmatpush.bf16.msra.mxu0 %v438
        %477 = vmatpush.bf16.msra.mxu0 %v437
        %478 = vmatpush.bf16.msra.mxu0 %v436
        %479 = vmatpush.bf16.msra.mxu0 %v435
        %480 = vmatmul.bf16.gmra.mxu0 %v326
        %v481 = vpop.f32.mrf.mxu0
        %v482 = vadd.f32 %v469, %v481
        %v483 = vpop.f32.mrf.mxu0
        %484 = vdwg.mxu0
        %v485 = vld [vmem:[%s288] sm:$0xff]
        %v486 = vadd.f32 %v482, %v485
        %487 = vadd.xlane.f32.xlu0 %v486
        %v488 = vpop.xlane.xlu0 %487
        %v489 = vmul.f32 %v486, %v486
        %490 = vadd.xlane.f32.xlu0 %v489
        %v491 = vpop.xlane.xlu0 %490
        %v492 = vmul.f32 %v488, 0.0078125
        %v493 = vmul.f32 %v491, 0.0078125
        %v494 = vmul.f32 %v492, %v492
        %v495 = vsub.f32 %v493, %v494
        %v496 = vmax.f32 %v495, 0.0
        %v497 = vadd.f32 %v496, 1e-05
        %v498 = vrsqrt.pop %v497
        %v499 = vmul.f32 %v498, %v497
        %v500 = vmul.f32 %v499, %v498
        %v501 = vmul.f32 0.5, %v500
        %v502 = vsub.f32 1.5, %v501
        %v503 = vmul.f32 %v498, %v502
        %vm504 = vweird.f32 %v497
        %vm505 = vweird.f32 %v498
        %vm506 = vmor %vm504, %vm505
        %v507 = vsel %vm506, %v498, %v503
        %v508 = vsub.f32 %v486, %v492
        %v509 = vmul.f32 %v508, %v507
        %v510 = vld [vmem:[%s4] sm:$0x1]
        %v512 = vperm.slane %v510, 0
        %v514 = vmul.f32 %v509, %v512
        %v515 = vld [vmem:[%s5] sm:$0x1]
        %v517 = vperm.slane %v515, 0
        %v519 = vadd.f32 %v514, %v517
        %520 = vst [vmem:[%s322] sm:$0xff] %v519
        %s521 = sand.u32 %s168, 1
        %s522 = scalar_lea.sflag [#allocation4], %s521
        %s523 = sand.u32 %s168, 1
        %s524 = smul.addr %s523, 8
        %s525 = scalar_lea.vmem [#allocation8], %s524
        // Predicated region
        $region57: #{tpu_custom_call.1} parent=43 // pred_check
          %p526 = pneg %p178
        $region58: #{tpu_custom_call.1} parent=43 // pred_check_branch
          %528 = sbr.rel (%p526) target = $region60
        $region59: #{tpu_custom_call.1} parent=43 // pred_region
          %530 = vsyncadd %s522, 0
          %s531 = smul.addr %s24, 8
          %s532 = scalar_lea.hbm %s6, %s531
          %s534 = sshll.u32 %s525, 4
          %s535 = int_to_ptr.vmem [resolvable:$true] %s534
          %s536 = sshll.u32 %s532, 4
          %s537 = int_to_ptr.hbm [resolvable:$true] %s536
          %539 = dma.vmem_to_hbm [thread:$0]  %s535, 128, %s537, %s522
        $region60: #{tpu_custom_call.1} parent=43 // pred_fallthru
          _
      $region44: #{tpu_custom_call.1} parent=5 // pred_fallthru
        _
      %p540 = scmp.le.s32.totalorder 2, %s19
      // Predicated region
      $region61: #{tpu_custom_call.1} parent=5 // pred_check
        %p541 = pneg %p540
      $region62: #{tpu_custom_call.1} parent=5 // pred_check_branch
        %543 = sbr.rel (%p541) target = $region64
      $region63: #{tpu_custom_call.1} parent=5 // pred_region
        %s544 = ssub.s32 %s19, 2
        // Predicated region
        $region65: #{tpu_custom_call.1} parent=63 // pred_check
          %p545 = pneg %p184
        $region66: #{tpu_custom_call.1} parent=63 // pred_check_branch
          %547 = sbr.rel (%p545) target = $region68
        $region67: #{tpu_custom_call.1} parent=63 // pred_region
          %s548 = sand.u32 %s169, 1
          %s549 = scalar_lea.sflag [#allocation4], %s548
          %s550 = sand.u32 %s169, 1
          %s551 = smul.addr %s550, 8
          %s552 = scalar_lea.vmem [#allocation8], %s551
          %554 = dma.done %s549, 128
        $region68: #{tpu_custom_call.1} parent=63 // pred_fallthru
          _
      $region64: #{tpu_custom_call.1} parent=5 // pred_fallthru
        _
    $region6: #{tpu_custom_call.1} parent=1 // loop_footer
      %s23 = sadd.s32 1, %s19
    $region7: #{tpu_custom_call.1} parent=1 // loop_footer_branch
      %18 = sbr.rel target = $region3
    $region8: #{tpu_custom_call.1} parent=1 // loop_exit
      _
    %555 = vsyncpa [#allocation3], 1
    %s556 = scalar_lea.sflag [#allocation3], 1
    %557 = vsyncpa %s556, 1
    %558 = vsyncpa [#allocation6], 1
    %559 = vsyncpa [#allocation4], 1
    %s560 = scalar_lea.sflag [#allocation4], 1
    %561 = vsyncpa %s560, 1

// kernel: tpu_custom_call.1
$region0: #{tpu_custom_call.1}
  #allocation0 [shape = 'u32[]', space=smem, size = 0x4, offset = 0x4, fixed_abs, tag = 'smem constant byte address 0x4 - core index']
  #allocation1 [shape = 'u32[72,128]{1,0:T(1,128)}', space=vmem, size = 0x9000, scoped, tag = 'internal scratch']
  %s0 = inlined_call_operand.hbm [shape: f32[16,256], index: 0, kind: input, shape index: {}]
  %s1 = inlined_call_operand.hbm [shape: bf16[256,128], index: 1, kind: input, shape index: {}]
  %s2 = inlined_call_operand.vmem [shape: f32[1,128], index: 2, kind: input, shape index: {}]
  %s3 = inlined_call_operand.hbm [shape: f32[16,128], index: 3, kind: input, shape index: {}]
  %s4 = inlined_call_operand.vmem [shape: f32[1,128], index: 4, kind: input, shape index: {}]
  %s5 = inlined_call_operand.vmem [shape: f32[1,128], index: 5, kind: input, shape index: {}]
  %s6 = inlined_call_operand.hbm [shape: f32[16,128], index: 6, kind: output, shape index: {}]
  %s7 = sld [smem:[#allocation0]]
  $region69: #{tpu_custom_call.1} parent=0
    _
  %s9 = ssub.s32 1, %s7
  %s10 = scalar_select 0, %s9, %s7
  $region1: #{tpu_custom_call.1} parent=0
    #allocation2 [shape = 'u8[16384]{0}', space=vmem, size = 0x4000, scoped, tag = 'input window, operand 0']
    #allocation3 [shape = 's32[2]{0}', space=sflag, size = 0x8, scoped, tag = 'scoped memory for tpu_custom_call.1']
    #allocation4 [shape = 's32[2]{0}', space=sflag, size = 0x8, scoped, tag = 'scoped memory for tpu_custom_call.1']
    #allocation5 [shape = 'u8[65536]{0}', space=vmem, size = 0x10000, scoped, tag = 'input window, operand 1, single buffered']
    #allocation6 [shape = 's32[1]{0}', space=sflag, size = 0x4, scoped, tag = 'scoped memory for tpu_custom_call.1']
    #allocation7 [shape = 'u8[8192]{0}', space=vmem, size = 0x2000, scoped, tag = 'input window, operand 3']
    #allocation8 [shape = 'u8[8192]{0}', space=vmem, size = 0x2000, scoped, tag = 'output window, operand 0']
    %11 = vsyncpa [#allocation3], 0
    %s12 = scalar_lea.sflag [#allocation3], 1
    %13 = vsyncpa %s12, 0
    %14 = vsyncpa [#allocation6], 0
    %15 = vsyncpa [#allocation4], 0
    %s16 = scalar_lea.sflag [#allocation4], 1
    %17 = vsyncpa %s16, 0
    loop: start=0, step=1, limit=4
    $region2: #{tpu_custom_call.1} parent=1 // loop_pre_header
      _
    $region3: #{tpu_custom_call.1} parent=1 // loop_header
      %s19 = sphi 0, %s23
      %p20 = scmp.ge.s32.totalorder %s19, 4
      %s29 = sphi 0, %s31
      %s32 = sphi 0, %s29
      %s33 = sphi 0, %s32
      %s49 = sphi 0, %s33
      %s53 = sphi 0, %s53
      %s55 = sphi 0, %s53
      %s56 = sphi 0, %s55
      %s70 = sphi 0, %s56
      %s74 = sphi 0, %s74
      %s76 = sphi 0, %s74
      %s77 = sphi 0, %s76
      %s91 = sphi 0, %s77
      %s97 = sphi 0, %s99
      %s100 = sphi 0, %s97
      %s101 = sphi 0, %s100
      %s117 = sphi 0, %s101
      %s121 = sphi 0, %s121
      %s123 = sphi 0, %s121
      %s124 = sphi 0, %s123
      %s138 = sphi 0, %s124
      %s142 = sphi 0, %s142
      %s144 = sphi 0, %s142
      %s145 = sphi 0, %s144
      %s159 = sphi 0, %s145
      %s165 = sphi 0, %s167
      %s168 = sphi 0, %s165
      %s169 = sphi 0, %s168
      %s185 = sphi 0, %s169
    $region4: #{tpu_custom_call.1} parent=1 // loop_header_branch
      %22 = sbr.rel (%p20) target = $region8
    $region5: #{tpu_custom_call.1} parent=1 // loop_body
      %s24 = ssub.s32 %s19, 1
      %s25 = ssub.s32 %s19, 2
      %s26 = sadd.s32 %s19, 1
      %s27 = ssub.s32 %s19, %s26
      %p28 = scmp.eq.s32.totalorder %s27, 0
      %s30 = sadd.s32 %s29, 1
      %s31 = scalar_select %p28, %s29, %s30
      %p34 = pneg %p28
      %p35 = scmp.eq.s32.totalorder %s19, 1
      %p36 = por %p34, %p35
      %p37 = scmp.ne.s32.totalorder %s29, %s32
      %p38 = scmp.eq.s32.totalorder %s19, 0
      %p39 = por %p37, %p38
      %p40 = scmp.ne.s32.totalorder %s29, %s32
      %p41 = scmp.eq.s32.totalorder %s24, 1
      %p42 = por %p40, %p41
      %p43 = scmp.ne.s32.totalorder %s32, %s33
      %p44 = scmp.eq.s32.totalorder %s24, 0
      %p45 = por %p43, %p44
      %p46 = scmp.ne.s32.totalorder %s32, %s33
      %p47 = scmp.eq.s32.totalorder %s25, 1
      %p48 = por %p46, %p47
      %p50 = scmp.ne.s32.totalorder %s33, %s49
      %p51 = scmp.eq.s32.totalorder %s25, 0
      %p52 = por %p50, %p51
      %s54 = sadd.s32 %s53, 1
      %p57 = scmp.eq.s32.totalorder %s19, 1
      %p58 = scmp.ne.s32.totalorder %s53, %s55
      %p59 = scmp.eq.s32.totalorder %s19, 0
      %p60 = por %p58, %p59
      %p61 = scmp.ne.s32.totalorder %s53, %s55
      %p62 = scmp.eq.s32.totalorder %s24, 1
      %p63 = por %p61, %p62
      %p64 = scmp.ne.s32.totalorder %s55, %s56
      %p65 = scmp.eq.s32.totalorder %s24, 0
      %p66 = por %p64, %p65
      %p67 = scmp.ne.s32.totalorder %s55, %s56
      %p68 = scmp.eq.s32.totalorder %s25, 1
      %p69 = por %p67, %p68
      %p71 = scmp.ne.s32.totalorder %s56, %s70
      %p72 = scmp.eq.s32.totalorder %s25, 0
      %p73 = por %p71, %p72
      %s75 = sadd.s32 %s74, 1
      %p78 = scmp.eq.s32.totalorder %s19, 1
      %p79 = scmp.ne.s32.totalorder %s74, %s76
      %p80 = scmp.eq.s32.totalorder %s19, 0
      %p81 = por %p79, %p80
      %p82 = scmp.ne.s32.totalorder %s74, %s76
      %p83 = scmp.eq.s32.totalorder %s24, 1
      %p84 = por %p82, %p83
      %p85 = scmp.ne.s32.totalorder %s76, %s77
      %p86 = scmp.eq.s32.totalorder %s24, 0
      %p87 = por %p85, %p86
      %p88 = scmp.ne.s32.totalorder %s76, %s77
      %p89 = scmp.eq.s32.totalorder %s25, 1
      %p90 = por %p88, %p89
      %p92 = scmp.ne.s32.totalorder %s77, %s91
      %p93 = scmp.eq.s32.totalorder %s25, 0
      %p94 = por %p92, %p93
      %s95 = ssub.s32 %s19, %s26
      %p96 = scmp.eq.s32.totalorder %s95, 0
      %s98 = sadd.s32 %s97, 1
      %s99 = scalar_select %p96, %s97, %s98
      %p102 = pneg %p96
      %p103 = scmp.eq.s32.totalorder %s19, 1
      %p104 = por %p102, %p103
      %p105 = scmp.ne.s32.totalorder %s97, %s100
      %p106 = scmp.eq.s32.totalorder %s19, 0
      %p107 = por %p105, %p106
      %p108 = scmp.ne.s32.totalorder %s97, %s100
      %p109 = scmp.eq.s32.totalorder %s24, 1
      %p110 = por %p108, %p109
      %p111 = scmp.ne.s32.totalorder %s100, %s101
      %p112 = scmp.eq.s32.totalorder %s24, 0
      %p113 = por %p111, %p112
      %p114 = scmp.ne.s32.totalorder %s100, %s101
      %p115 = scmp.eq.s32.totalorder %s25, 1
      %p116 = por %p114, %p115
      %p118 = scmp.ne.s32.totalorder %s101, %s117
      %p119 = scmp.eq.s32.totalorder %s25, 0
      %p120 = por %p118, %p119
      %s122 = sadd.s32 %s121, 1
      %p125 = scmp.eq.s32.totalorder %s19, 1
      %p126 = scmp.ne.s32.totalorder %s121, %s123
      %p127 = scmp.eq.s32.totalorder %s19, 0
      %p128 = por %p126, %p127
      %p129 = scmp.ne.s32.totalorder %s121, %s123
      %p130 = scmp.eq.s32.totalorder %s24, 1
      %p131 = por %p129, %p130
      %p132 = scmp.ne.s32.totalorder %s123, %s124
      %p133 = scmp.eq.s32.totalorder %s24, 0
      %p134 = por %p132, %p133
      %p135 = scmp.ne.s32.totalorder %s123, %s124
      %p136 = scmp.eq.s32.totalorder %s25, 1
      %p137 = por %p135, %p136
      %p139 = scmp.ne.s32.totalorder %s124, %s138
      %p140 = scmp.eq.s32.totalorder %s25, 0
      %p141 = por %p139, %p140
      %s143 = sadd.s32 %s142, 1
      %p146 = scmp.eq.s32.totalorder %s19, 1
      %p147 = scmp.ne.s32.totalorder %s142, %s144
      %p148 = scmp.eq.s32.totalorder %s19, 0
      %p149 = por %p147, %p148
      %p150 = scmp.ne.s32.totalorder %s142, %s144
      %p151 = scmp.eq.s32.totalorder %s24, 1
      %p152 = por %p150, %p151
      %p153 = scmp.ne.s32.totalorder %s144, %s145
      %p154 = scmp.eq.s32.totalorder %s24, 0
      %p155 = por %p153, %p154
      %p156 = scmp.ne.s32.totalorder %s144, %s145
      %p157 = scmp.eq.s32.totalorder %s25, 1
      %p158 = por %p156, %p157
      %p160 = scmp.ne.s32.totalorder %s145, %s159
      %p161 = scmp.eq.s32.totalorder %s25, 0
      %p162 = por %p160, %p161
      %s163 = ssub.s32 %s19, %s26
      %p164 = scmp.eq.s32.totalorder %s163, 0
      %s166 = sadd.s32 %s165, 1
      %s167 = scalar_select %p164, %s165, %s166
      %p170 = pneg %p164
      %p171 = scmp.eq.s32.totalorder %s19, 1
      %p172 = por %p170, %p171
      %p173 = scmp.ne.s32.totalorder %s165, %s168
      %p174 = scmp.eq.s32.totalorder %s19, 0
      %p175 = por %p173, %p174
      %p176 = scmp.ne.s32.totalorder %s165, %s168
      %p177 = scmp.eq.s32.totalorder %s24, 1
      %p178 = por %p176, %p177
      %p179 = scmp.ne.s32.totalorder %s168, %s169
      %p180 = scmp.eq.s32.totalorder %s24, 0
      %p181 = por %p179, %p180
      %p182 = scmp.ne.s32.totalorder %s168, %s169
      %p183 = scmp.eq.s32.totalorder %s25, 1
      %p184 = por %p182, %p183
      %p186 = scmp.ne.s32.totalorder %s169, %s185
      %p187 = scmp.eq.s32.totalorder %s25, 0
      %p188 = por %p186, %p187
      %p189 = scmp.le.s32.totalorder 1, %s19
      %p190 = scmp.lt.s32.totalorder %s19, 3
      %p191 = pnand %p189, %p190
      %p192 = pneg %p191
      // Predicated region
      $region9: #{tpu_custom_call.1} parent=5 // pred_check
        _
      $region10: #{tpu_custom_call.1} parent=5 // pred_check_branch
        %194 = sbr.rel (%p191) target = $region12
      $region11: #{tpu_custom_call.1} parent=5 // pred_region
        %s195 = ssub.s32 %s19, 1
        // Predicated region
        $region13: #{tpu_custom_call.1} parent=11 // pred_check
          %p196 = pneg %p66
        $region14: #{tpu_custom_call.1} parent=11 // pred_check_branch
          %198 = sbr.rel (%p196) target = $region16
        $region15: #{tpu_custom_call.1} parent=11 // pred_region
          %200 = vsyncadd [#allocation6], 0
          %s201 = sshll.u32 %s1, 4
          %s202 = int_to_ptr.hbm [resolvable:$true] %s201
          %s203 = sshll.u32 [#allocation5], 4
          %s204 = int_to_ptr.vmem [resolvable:$true] %s203
          %209 = dma.hbm_to_vmem [thread:$0]  %s202, 2048, %s204, [#allocation6], 64, 64, 4
        $region16: #{tpu_custom_call.1} parent=11 // pred_fallthru
          _
        // Predicated region
        $region17: #{tpu_custom_call.1} parent=11 // pred_check
          %p210 = pneg %p87
        $region18: #{tpu_custom_call.1} parent=11 // pred_check_branch
          %212 = sbr.rel (%p210) target = $region20
        $region19: #{tpu_custom_call.1} parent=11 // pred_region
          _
        $region20: #{tpu_custom_call.1} parent=11 // pred_fallthru
          _
        // Predicated region
        $region21: #{tpu_custom_call.1} parent=11 // pred_check
          %p213 = pneg %p134
        $region22: #{tpu_custom_call.1} parent=11 // pred_check_branch
          %215 = sbr.rel (%p213) target = $region24
        $region23: #{tpu_custom_call.1} parent=11 // pred_region
          _
        $region24: #{tpu_custom_call.1} parent=11 // pred_fallthru
          _
        // Predicated region
        $region25: #{tpu_custom_call.1} parent=11 // pred_check
          %p216 = pneg %p155
        $region26: #{tpu_custom_call.1} parent=11 // pred_check_branch
          %218 = sbr.rel (%p216) target = $region28
        $region27: #{tpu_custom_call.1} parent=11 // pred_region
          _
        $region28: #{tpu_custom_call.1} parent=11 // pred_fallthru
          _
      $region12: #{tpu_custom_call.1} parent=5 // pred_fallthru
        _
      %p219 = scmp.lt.s32.totalorder %s19, 2
      // Predicated region
      $region29: #{tpu_custom_call.1} parent=5 // pred_check
        %p220 = pneg %p219
      $region30: #{tpu_custom_call.1} parent=5 // pred_check_branch
        %222 = sbr.rel (%p220) target = $region32
      $region31: #{tpu_custom_call.1} parent=5 // pred_region
        // Predicated region
        $region33: #{tpu_custom_call.1} parent=31 // pred_check
          %p223 = pneg %p39
        $region34: #{tpu_custom_call.1} parent=31 // pred_check_branch
          %225 = sbr.rel (%p223) target = $region36
        $region35: #{tpu_custom_call.1} parent=31 // pred_region
          %s226 = sand.u32 %s19, 1
          %s227 = scalar_lea.sflag [#allocation3], %s226
          %s228 = sand.u32 %s29, 1
          %s229 = smul.addr %s228, 16
          %s230 = scalar_lea.vmem [#allocation2], %s229
          %232 = vsyncadd %s227, 0
          %s233 = smul.addr %s19, 2
          %s234 = smul.addr %s233, 8
          %s235 = scalar_lea.hbm %s0, %s234
          %s237 = sshll.u32 %s235, 4
          %s238 = int_to_ptr.hbm [resolvable:$true] %s237
          %s239 = sshll.u32 %s230, 4
          %s240 = int_to_ptr.vmem [resolvable:$true] %s239
          %242 = dma.hbm_to_vmem [thread:$0]  %s238, 256, %s240, %s227
        $region36: #{tpu_custom_call.1} parent=31 // pred_fallthru
          _
        // Predicated region
        $region37: #{tpu_custom_call.1} parent=31 // pred_check
          %p243 = pneg %p107
        $region38: #{tpu_custom_call.1} parent=31 // pred_check_branch
          %245 = sbr.rel (%p243) target = $region40
        $region39: #{tpu_custom_call.1} parent=31 // pred_region
          %s246 = sand.u32 %s19, 1
          %s247 = scalar_lea.sflag [#allocation3], %s246
          %s248 = sand.u32 %s97, 1
          %s249 = smul.addr %s248, 8
          %s250 = scalar_lea.vmem [#allocation7], %s249
          %252 = vsyncadd %s247, 0
          %s253 = smul.addr %s19, 8
          %s254 = scalar_lea.hbm %s3, %s253
          %s256 = sshll.u32 %s254, 4
          %s257 = int_to_ptr.hbm [resolvable:$true] %s256
          %s258 = sshll.u32 %s250, 4
          %s259 = int_to_ptr.vmem [resolvable:$true] %s258
          %261 = dma.hbm_to_vmem [thread:$0]  %s257, 128, %s259, %s247
        $region40: #{tpu_custom_call.1} parent=31 // pred_fallthru
          _
      $region32: #{tpu_custom_call.1} parent=5 // pred_fallthru
        _
      %p262 = scmp.le.s32.totalorder 1, %s19
      %p263 = scmp.lt.s32.totalorder %s19, 3
      %p264 = pnand %p262, %p263
      %p265 = pneg %p264
      // Predicated region
      $region41: #{tpu_custom_call.1} parent=5 // pred_check
        _
      $region42: #{tpu_custom_call.1} parent=5 // pred_check_branch
        %267 = sbr.rel (%p264) target = $region44
      $region43: #{tpu_custom_call.1} parent=5 // pred_region
        %s268 = ssub.s32 %s19, 1
        %s269 = sand.u32 %s24, 1
        %s270 = scalar_lea.sflag [#allocation3], %s269
        %s271 = sand.u32 %s32, 1
        %s272 = smul.addr %s271, 16
        %s273 = scalar_lea.vmem [#allocation2], %s272
        // Predicated region
        $region45: #{tpu_custom_call.1} parent=43 // pred_check
          %p274 = pneg %p45
        $region46: #{tpu_custom_call.1} parent=43 // pred_check_branch
          %276 = sbr.rel (%p274) target = $region48
        $region47: #{tpu_custom_call.1} parent=43 // pred_region
          %278 = dma.done %s270, 256
        $region48: #{tpu_custom_call.1} parent=43 // pred_fallthru
          _
        // Predicated region
        $region49: #{tpu_custom_call.1} parent=43 // pred_check
          %p279 = pneg %p66
        $region50: #{tpu_custom_call.1} parent=43 // pred_check_branch
          %281 = sbr.rel (%p279) target = $region52
        $region51: #{tpu_custom_call.1} parent=43 // pred_region
          %283 = dma.done [#allocation6], 2048
        $region52: #{tpu_custom_call.1} parent=43 // pred_fallthru
          _
        %s284 = sand.u32 %s24, 1
        %s285 = scalar_lea.sflag [#allocation3], %s284
        %s286 = sand.u32 %s100, 1
        %s287 = smul.addr %s286, 8
        %s288 = scalar_lea.vmem [#allocation7], %s287
        // Predicated region
        $region53: #{tpu_custom_call.1} parent=43 // pred_check
          %p289 = pneg %p113
        $region54: #{tpu_custom_call.1} parent=43 // pred_check_branch
          %291 = sbr.rel (%p289) target = $region56
        $region55: #{tpu_custom_call.1} parent=43 // pred_region
          %293 = dma.done %s285, 128
        $region56: #{tpu_custom_call.1} parent=43 // pred_fallthru
          _
        %s294 = sand.u32 %s24, 1
        %s295 = scalar_lea.sflag [#allocation3], %s294
        %s296 = sand.u32 %s32, 1
        %s297 = smul.addr %s296, 16
        %s298 = scalar_lea.vmem [#allocation2], %s297
        %p299 = pneg %p45
        %p300 = pneg %p42
        %p301 = pneg %p66
        %p302 = pneg %p63
        %p303 = pneg %p87
        %p304 = pneg %p84
        %s305 = sand.u32 %s24, 1
        %s306 = scalar_lea.sflag [#allocation3], %s305
        %s307 = sand.u32 %s100, 1
        %s308 = smul.addr %s307, 8
        %s309 = scalar_lea.vmem [#allocation7], %s308
        %p310 = pneg %p113
        %p311 = pneg %p110
        %p312 = pneg %p134
        %p313 = pneg %p131
        %p314 = pneg %p155
        %p315 = pneg %p152
        %p316 = pneg %p181
        %p317 = pneg %p178
        %s318 = sand.u32 %s168, 1
        %s319 = scalar_lea.sflag [#allocation4], %s318
        %s320 = sand.u32 %s168, 1
        %s321 = smul.addr %s320, 8
        %s322 = scalar_lea.vmem [#allocation8], %s321
        %v323 = vld [vmem:[%s273] sm:$0xff]
        %v324 = vld [vmem:[%s273 + $0x8] sm:$0xff]
        %v325 = vpack.c.bf16 %v323, %v323
        %v326 = vpack.c.bf16 %v324, %v324
        %v327 = vld [vmem:[#allocation5] sm:$0xf]
        %v328 = vld [vmem:[#allocation5 + $0x4] sm:$0xf]
        %v329 = vld [vmem:[#allocation5 + $0x8] sm:$0xf]
        %v330 = vld [vmem:[#allocation5 + $0xc] sm:$0xf]
        %v331 = vld [vmem:[#allocation5 + $0x10] sm:$0xf]
        %v332 = vld [vmem:[#allocation5 + $0x14] sm:$0xf]
        %v333 = vld [vmem:[#allocation5 + $0x18] sm:$0xf]
        %v334 = vld [vmem:[#allocation5 + $0x1c] sm:$0xf]
        %v335 = vld [vmem:[#allocation5 + $0x20] sm:$0xf]
        %v336 = vld [vmem:[#allocation5 + $0x24] sm:$0xf]
        %v337 = vld [vmem:[#allocation5 + $0x28] sm:$0xf]
        %v338 = vld [vmem:[#allocation5 + $0x2c] sm:$0xf]
        %v339 = vld [vmem:[#allocation5 + $0x30] sm:$0xf]
        %v340 = vld [vmem:[#allocation5 + $0x34] sm:$0xf]
        %v341 = vld [vmem:[#allocation5 + $0x38] sm:$0xf]
        %v342 = vld [vmem:[#allocation5 + $0x3c] sm:$0xf]
        %v343 = vld [vmem:[#allocation5 + $0x40] sm:$0xf]
        %v344 = vld [vmem:[#allocation5 + $0x44] sm:$0xf]
        %v345 = vld [vmem:[#allocation5 + $0x48] sm:$0xf]
        %v346 = vld [vmem:[#allocation5 + $0x4c] sm:$0xf]
        %v347 = vld [vmem:[#allocation5 + $0x50] sm:$0xf]
        %v348 = vld [vmem:[#allocation5 + $0x54] sm:$0xf]
        %v349 = vld [vmem:[#allocation5 + $0x58] sm:$0xf]
        %v350 = vld [vmem:[#allocation5 + $0x5c] sm:$0xf]
        %v351 = vld [vmem:[#allocation5 + $0x60] sm:$0xf]
        %v352 = vld [vmem:[#allocation5 + $0x64] sm:$0xf]
        %v353 = vld [vmem:[#allocation5 + $0x68] sm:$0xf]
        %v354 = vld [vmem:[#allocation5 + $0x6c] sm:$0xf]
        %v355 = vld [vmem:[#allocation5 + $0x70] sm:$0xf]
        %v356 = vld [vmem:[#allocation5 + $0x74] sm:$0xf]
        %v357 = vld [vmem:[#allocation5 + $0x78] sm:$0xf]
        %v358 = vld [vmem:[#allocation5 + $0x7c] sm:$0xf]
        %v359 = vld [vmem:[%s2] sm:$0x1]
        %v361 = vperm.slane %v359, 0
        %v395 = vunpack.c.l.b16 %v327
        %v396 = vunpack.c.l.b16 %v328
        %v397 = vunpack.c.l.b16 %v329
        %v398 = vunpack.c.l.b16 %v330
        %v399 = vunpack.c.l.b16 %v331
        %v400 = vunpack.c.l.b16 %v332
        %v401 = vunpack.c.l.b16 %v333
        %v402 = vunpack.c.l.b16 %v334
        %v403 = vunpack.c.l.b16 %v335
        %v404 = vunpack.c.l.b16 %v336
        %v405 = vunpack.c.l.b16 %v337
        %v406 = vunpack.c.l.b16 %v338
        %v407 = vunpack.c.l.b16 %v339
        %v408 = vunpack.c.l.b16 %v340
        %v409 = vunpack.c.l.b16 %v341
        %v410 = vunpack.c.l.b16 %v342
        %v411 = vunpack.c.l.b16 %v343
        %v412 = vunpack.c.l.b16 %v344
        %v413 = vunpack.c.l.b16 %v345
        %v414 = vunpack.c.l.b16 %v346
        %v415 = vunpack.c.l.b16 %v347
        %v416 = vunpack.c.l.b16 %v348
        %v417 = vunpack.c.l.b16 %v349
        %v418 = vunpack.c.l.b16 %v350
        %v419 = vunpack.c.l.b16 %v351
        %v420 = vunpack.c.l.b16 %v352
        %v421 = vunpack.c.l.b16 %v353
        %v422 = vunpack.c.l.b16 %v354
        %v423 = vunpack.c.l.b16 %v355
        %v424 = vunpack.c.l.b16 %v356
        %v425 = vunpack.c.l.b16 %v357
        %v426 = vunpack.c.l.b16 %v358
        %v427 = vpack.c.b16 %v396, %v395
        %v428 = vpack.c.b16 %v398, %v397
        %v429 = vpack.c.b16 %v400, %v399
        %v430 = vpack.c.b16 %v402, %v401
        %v431 = vpack.c.b16 %v404, %v403
        %v432 = vpack.c.b16 %v406, %v405
        %v433 = vpack.c.b16 %v408, %v407
        %v434 = vpack.c.b16 %v410, %v409
        %v435 = vpack.c.b16 %v412, %v411
        %v436 = vpack.c.b16 %v414, %v413
        %v437 = vpack.c.b16 %v416, %v415
        %v438 = vpack.c.b16 %v418, %v417
        %v439 = vpack.c.b16 %v420, %v419
        %v440 = vpack.c.b16 %v422, %v421
        %v441 = vpack.c.b16 %v424, %v423
        %v442 = vpack.c.b16 %v426, %v425
        %459 = vmatpush.bf16.msra.mxu0 %v434
        %460 = vmatpush.bf16.msra.mxu0 %v433
        %461 = vmatpush.bf16.msra.mxu0 %v432
        %462 = vmatpush.bf16.msra.mxu0 %v431
        %463 = vmatpush.bf16.msra.mxu0 %v430
        %464 = vmatpush.bf16.msra.mxu0 %v429
        %465 = vmatpush.bf16.msra.mxu0 %v428
        %466 = vmatpush.bf16.msra.mxu0 %v427
        %467 = vmatmul.bf16.gmra.mxu0 %v325
        %v468 = vpop.f32.mrf.mxu0
        %v469 = vadd.f32 %v361, %v468
        %v470 = vpop.f32.mrf.mxu0
        %471 = vdwg.mxu0
        %472 = vmatpush.bf16.msra.mxu0 %v442
        %473 = vmatpush.bf16.msra.mxu0 %v441
        %474 = vmatpush.bf16.msra.mxu0 %v440
        %475 = vmatpush.bf16.msra.mxu0 %v439
        %476 = vmatpush.bf16.msra.mxu0 %v438
        %477 = vmatpush.bf16.msra.mxu0 %v437
        %478 = vmatpush.bf16.msra.mxu0 %v436
        %479 = vmatpush.bf16.msra.mxu0 %v435
        %480 = vmatmul.bf16.gmra.mxu0 %v326
        %v481 = vpop.f32.mrf.mxu0
        %v482 = vadd.f32 %v469, %v481
        %v483 = vpop.f32.mrf.mxu0
        %484 = vdwg.mxu0
        %v485 = vld [vmem:[%s288] sm:$0xff]
        %v486 = vadd.f32 %v482, %v485
        %487 = vadd.xlane.f32.xlu0 %v486
        %v488 = vpop.xlane.xlu0 %487
        %v489 = vmul.f32 %v486, %v486
        %490 = vadd.xlane.f32.xlu0 %v489
        %v491 = vpop.xlane.xlu0 %490
        %v492 = vmul.f32 %v488, 0.0078125
        %v493 = vmul.f32 %v491, 0.0078125
        %v494 = vmul.f32 %v492, %v492
        %v495 = vsub.f32 %v493, %v494
        %v496 = vmax.f32 %v495, 0.0
        %v497 = vadd.f32 %v496, 1e-05
        %v498 = vrsqrt.pop %v497
        %v499 = vmul.f32 %v498, %v497
        %v500 = vmul.f32 %v499, %v498
        %v501 = vmul.f32 0.5, %v500
        %v502 = vsub.f32 1.5, %v501
        %v503 = vmul.f32 %v498, %v502
        %vm504 = vweird.f32 %v497
        %vm505 = vweird.f32 %v498
        %vm506 = vmor %vm504, %vm505
        %v507 = vsel %vm506, %v498, %v503
        %v508 = vsub.f32 %v486, %v492
        %v509 = vmul.f32 %v508, %v507
        %v510 = vld [vmem:[%s4] sm:$0x1]
        %v512 = vperm.slane %v510, 0
        %v514 = vmul.f32 %v509, %v512
        %v515 = vld [vmem:[%s5] sm:$0x1]
        %v517 = vperm.slane %v515, 0
        %v519 = vadd.f32 %v514, %v517
        %520 = vst [vmem:[%s322] sm:$0xff] %v519
        %s521 = sand.u32 %s168, 1
        %s522 = scalar_lea.sflag [#allocation4], %s521
        %s523 = sand.u32 %s168, 1
        %s524 = smul.addr %s523, 8
        %s525 = scalar_lea.vmem [#allocation8], %s524
        // Predicated region
        $region57: #{tpu_custom_call.1} parent=43 // pred_check
          %p526 = pneg %p178
        $region58: #{tpu_custom_call.1} parent=43 // pred_check_branch
          %528 = sbr.rel (%p526) target = $region60
        $region59: #{tpu_custom_call.1} parent=43 // pred_region
          %530 = vsyncadd %s522, 0
          %s531 = smul.addr %s24, 8
          %s532 = scalar_lea.hbm %s6, %s531
          %s534 = sshll.u32 %s525, 4
          %s535 = int_to_ptr.vmem [resolvable:$true] %s534
          %s536 = sshll.u32 %s532, 4
          %s537 = int_to_ptr.hbm [resolvable:$true] %s536
          %539 = dma.vmem_to_hbm [thread:$0]  %s535, 128, %s537, %s522
        $region60: #{tpu_custom_call.1} parent=43 // pred_fallthru
          _
      $region44: #{tpu_custom_call.1} parent=5 // pred_fallthru
        _
      %p540 = scmp.le.s32.totalorder 2, %s19
      // Predicated region
      $region61: #{tpu_custom_call.1} parent=5 // pred_check
        %p541 = pneg %p540
      $region62: #{tpu_custom_call.1} parent=5 // pred_check_branch
        %543 = sbr.rel (%p541) target = $region64
      $region63: #{tpu_custom_call.1} parent=5 // pred_region
        %s544 = ssub.s32 %s19, 2
        // Predicated region
        $region65: #{tpu_custom_call.1} parent=63 // pred_check
          %p545 = pneg %p184
        $region66: #{tpu_custom_call.1} parent=63 // pred_check_branch
          %547 = sbr.rel (%p545) target = $region68
        $region67: #{tpu_custom_call.1} parent=63 // pred_region
          %s548 = sand.u32 %s169, 1
          %s549 = scalar_lea.sflag [#allocation4], %s548
          %s550 = sand.u32 %s169, 1
          %s551 = smul.addr %s550, 8
          %s552 = scalar_lea.vmem [#allocation8], %s551
          %554 = dma.done %s549, 128
        $region68: #{tpu_custom_call.1} parent=63 // pred_fallthru
          _
      $region64: #{tpu_custom_call.1} parent=5 // pred_fallthru
        _
    $region6: #{tpu_custom_call.1} parent=1 // loop_footer
      %s23 = sadd.s32 1, %s19
    $region7: #{tpu_custom_call.1} parent=1 // loop_footer_branch
      %18 = sbr.rel target = $region3
    $region8: #{tpu_custom_call.1} parent=1 // loop_exit
      _
    %555 = vsyncpa [#allocation3], 1
    %s556 = scalar_lea.sflag [#allocation3], 1
    %557 = vsyncpa %s556, 1
    %558 = vsyncpa [#allocation6], 1
    %559 = vsyncpa [#allocation4], 1
    %s560 = scalar_lea.sflag [#allocation4], 1
    %561 = vsyncpa %s560, 1

</llo_original>
